<compile_context>
chip_gen: v5e
topology: v5e:2x2
jax: 0.10.0
libtpu: 0.0.40
codegen_flags: <defaults>
</compile_context>

<pallas_src>
import jax
import jax.numpy as jnp
from jax.experimental import pallas as pl
from jax.experimental.pallas import tpu as pltpu

NGF = 64
C = NGF * 4            # 256
H = W = 16
HW = H * W             # 256
NOISE_SCALE = 0.02


def _atten_kernel(sf_ref, noise_ref, out_ref):
    # sf_ref    : VMEM (Bt, C, K)   style features, channel-major
    # noise_ref : VMEM (Bt, C, HW)  pre-generated N(0, 1) noise
    # out_ref   : VMEM (Bt, C, HW)  aliased onto the noise buffer
    k = sf_ref.shape[-1]
    # Lane reduce over K -> (Bt, C, 1) column that broadcasts over HW.
    mean_col = jnp.sum(sf_ref[...], axis=-1, keepdims=True) * jnp.float32(1.0 / k)
    out_ref[...] = mean_col + noise_ref[...] * jnp.float32(NOISE_SCALE)


def _pick_bt(batch):
    # Largest divisor of B in {8, 4, 2, 1} that still leaves >= 2 grid steps
    # (so both v7x TensorCores get work).  B == 1 degenerates to one step.
    for bt in (8, 4, 2, 1):
        if batch % bt == 0 and batch // bt >= 2:
            return bt
    return 1


def ftgan_global_atten(style_features, B, K, *, key=None, noise=None, ngf=NGF):
    """style_features: any array with B*K*(ngf*4) elements (e.g. (B*K, 256)).

    Returns (B, ngf*4, 16, 16) float32, matching the PyTorch module.
    If `noise` is given it must reshape to (B, ngf*4, 256) (i.e. NCHW noise);
    note the noise buffer is donated (output is written in place over it).
    Otherwise standard-normal noise is drawn from `key`.
    """
    c = ngf * 4
    sf = jnp.asarray(style_features, jnp.float32).reshape(B, K, c)
    sf_ck = jnp.transpose(sf, (0, 2, 1))          # (B, C, K) — tiny array

    if noise is None:
        if key is None:
            key = jax.random.PRNGKey(0)
        noise = jax.random.normal(key, (B, c, HW), jnp.float32)
    else:
        noise = jnp.asarray(noise, jnp.float32).reshape(B, c, HW)

    bt = _pick_bt(B)
    grid = (B // bt,)

    out = pl.pallas_call(
        _atten_kernel,
        out_shape=jax.ShapeDtypeStruct((B, c, HW), jnp.float32),
        grid_spec=pl.GridSpec(
            grid=grid,
            in_specs=[
                pl.BlockSpec((bt, c, K), lambda b: (b, 0, 0)),
                pl.BlockSpec((bt, c, HW), lambda b: (b, 0, 0)),
            ],
            out_specs=pl.BlockSpec((bt, c, HW), lambda b: (b, 0, 0)),
        ),
        # Write mean + noise*0.02 in place over the noise buffer.
        input_output_aliases={1: 0},
        compiler_params=pltpu.CompilerParams(
            dimension_semantics=("parallel",)),
        cost_estimate=pl.CostEstimate(
            flops=2 * B * c * HW + B * c * K,
            transcendentals=0,
            bytes_accessed=4 * (B * c * K + 2 * B * c * HW)),
    )(sf_ck, noise)

    # Channel-major already: NCHW is a free reshape (no transpose, no HBM pass).
    return out.reshape(B, c, H, W)


if __name__ == "__main__":
    B, K = 2, 3
    key = jax.random.PRNGKey(0)
    k_sf, k_noise = jax.random.split(key)

    sf = jax.random.normal(k_sf, (B * K, C), jnp.float32)

    out = jax.block_until_ready(ftgan_global_atten(sf, B, K, key=k_noise))
    assert out.shape == (B, C, H, W), out.shape

    # Reference: regenerate the same noise from the same key into an
    # independent buffer (the kernel's in-place aliasing never touches it).
    noise_ref = jax.random.normal(k_noise, (B, C, HW), jnp.float32).reshape(B, C, H, W)
    mean = sf.reshape(B, K, C).mean(axis=1)
    ref = mean[:, :, None, None] + noise_ref * NOISE_SCALE
    max_err = float(jnp.max(jnp.abs(out - ref)))
    assert jnp.allclose(out, ref, rtol=1e-5, atol=1e-5), max_err

    # Residual noise should look like N(0, 0.02).
    resid = out - mean[:, :, None, None]
    assert abs(float(resid.mean())) < 5e-3, float(resid.mean())
    assert 0.015 < float(resid.std()) < 0.025, float(resid.std())

    print("KERNEL_OK")
</pallas_src>

<mosaic_0001>
module attributes {stable_mosaic.version = 11 : i64} {
  func.func @_atten_kernel(%arg0: i32, %arg1: memref<1x256x3xf32, #tpu.memory_space<vmem>>, %arg2: memref<1x256x256xf32, #tpu.memory_space<vmem>>, %arg3: memref<1x256x256xf32, #tpu.memory_space<vmem>>) attributes {dimension_semantics = [#tpu.dimension_semantics<parallel>], iteration_bounds = array<i64: 2>, scalar_prefetch = 0 : i64, scratch_operands = 0 : i64, tpu.core_type = #tpu.core_type<tc>, window_params = [{transform_indices = @transform_0, window_bounds = array<i64: 1, 256, 3>}, {transform_indices = @transform_1, window_bounds = array<i64: 1, 256, 256>}, {transform_indices = @transform_2, window_bounds = array<i64: 1, 256, 256>}]} {
    %c0 = arith.constant 0 : index
    %c0_0 = arith.constant 0 : index
    %c0_1 = arith.constant 0 : index
    %0 = vector.load %arg1[%c0, %c0_0, %c0_1] : memref<1x256x3xf32, #tpu.memory_space<vmem>>, vector<1x256x3xf32>
    %cst = arith.constant dense<0.000000e+00> : vector<1x256xf32>
    %1 = vector.multi_reduction <add>, %0, %cst [2] : vector<1x256x3xf32> to vector<1x256xf32>
    %2 = vector.shape_cast %1 : vector<1x256xf32> to vector<1x256x1xf32>
    %cst_2 = arith.constant 0.333333343 : f32
    %3 = vector.broadcast %cst_2 : f32 to vector<1x256x1xf32>
    %4 = arith.mulf %2, %3 : vector<1x256x1xf32>
    %c0_3 = arith.constant 0 : index
    %c0_4 = arith.constant 0 : index
    %c0_5 = arith.constant 0 : index
    %5 = vector.load %arg2[%c0_3, %c0_4, %c0_5] : memref<1x256x256xf32, #tpu.memory_space<vmem>>, vector<1x256x256xf32>
    %cst_6 = arith.constant 2.000000e-02 : f32
    %6 = vector.broadcast %cst_6 : f32 to vector<1x256x256xf32>
    %7 = arith.mulf %5, %6 : vector<1x256x256xf32>
    %8 = vector.broadcast %4 : vector<1x256x1xf32> to vector<1x256x256xf32>
    %9 = arith.addf %8, %7 : vector<1x256x256xf32>
    %c0_7 = arith.constant 0 : index
    %c0_8 = arith.constant 0 : index
    %c0_9 = arith.constant 0 : index
    %10 = vector.load %arg3[%c0_7, %c0_8, %c0_9] : memref<1x256x256xf32, #tpu.memory_space<vmem>>, vector<1x256x256xf32>
    tpu.vector_store %arg3[%c0_7, %c0_8, %c0_9], %9 {strides = array<i32>} : memref<1x256x256xf32, #tpu.memory_space<vmem>>, vector<1x256x256xf32>,
    return
  }
  func.func @transform_0(%arg0: i32) -> (i32, i32, i32) {
    %c0_i32 = arith.constant 0 : i32
    %c0_i32_0 = arith.constant 0 : i32
    %c0_i32_1 = arith.constant 0 : i32
    return %arg0, %c0_i32, %c0_i32_0 : i32, i32, i32
  }
  func.func @transform_1(%arg0: i32) -> (i32, i32, i32) {
    %c0_i32 = arith.constant 0 : i32
    %c0_i32_0 = arith.constant 0 : i32
    %c0_i32_1 = arith.constant 0 : i32
    return %arg0, %c0_i32, %c0_i32_0 : i32, i32, i32
  }
  func.func @transform_2(%arg0: i32) -> (i32, i32, i32) {
    %c0_i32 = arith.constant 0 : i32
    %c0_i32_0 = arith.constant 0 : i32
    %c0_i32_1 = arith.constant 0 : i32
    return %arg0, %c0_i32, %c0_i32_0 : i32, i32, i32
  }
}

</mosaic_0001>

<llo_original>
// kernel: tpu_custom_call.1
$region0: #{tpu_custom_call.1}
  #allocation0 [shape = 'u32[]', space=smem, size = 0x4, offset = 0x4, fixed_abs, tag = 'smem constant byte address 0x4 - core index']
  #allocation1 [shape = 'u32[72,128]{1,0:T(1,128)}', space=vmem, size = 0x9000, scoped, tag = 'internal scratch']
  %s0 = inlined_call_operand.vmem [shape: f32[2,256,3], index: 0, kind: input, shape index: {}]
  %s1 = inlined_call_operand.hbm [shape: f32[2,256,256], index: 1, kind: input, shape index: {}, may-alias: {1,2}]
  %s2 = inlined_call_operand.hbm [shape: f32[2,256,256], index: 2, kind: output, shape index: {}, may-alias: {1,2}]
  %s3 = sld [smem:[#allocation0]]
  $region45: #{tpu_custom_call.1} parent=0
    _
  %s5 = ssub.s32 1, %s3
  %s6 = scalar_select 0, %s5, %s3
  $region1: #{tpu_custom_call.1} parent=0
    #allocation2 [shape = 'u8[524288]{0}', space=vmem, size = 0x80000, scoped, tag = 'input window, operand 1']
    #allocation3 [shape = 's32[2]{0}', space=sflag, size = 0x8, scoped, tag = 'scoped memory for tpu_custom_call.1']
    #allocation4 [shape = 's32[2]{0}', space=sflag, size = 0x8, scoped, tag = 'scoped memory for tpu_custom_call.1']
    #allocation5 [shape = 'u8[524288]{0}', space=vmem, size = 0x80000, scoped, tag = 'output window, operand 0']
    %7 = vsyncpa [#allocation3], 0
    %s8 = scalar_lea.sflag [#allocation3], 1
    %9 = vsyncpa %s8, 0
    %10 = vsyncpa [#allocation4], 0
    %s11 = scalar_lea.sflag [#allocation4], 1
    %12 = vsyncpa %s11, 0
    loop: start=0, step=1, limit=4
    $region2: #{tpu_custom_call.1} parent=1 // loop_pre_header
      _
    $region3: #{tpu_custom_call.1} parent=1 // loop_header
      %s14 = sphi 0, %s18
      %p15 = scmp.ge.s32.totalorder %s14, 4
      %s24 = sphi 0, %s26
      %s27 = sphi 0, %s24
      %s28 = sphi 0, %s27
      %s44 = sphi 0, %s28
      %s50 = sphi 0, %s52
      %s53 = sphi 0, %s50
      %s54 = sphi 0, %s53
      %s70 = sphi 0, %s54
      %s76 = sphi 0, %s78
      %s79 = sphi 0, %s76
      %s80 = sphi 0, %s79
      %s96 = sphi 0, %s80
    $region4: #{tpu_custom_call.1} parent=1 // loop_header_branch
      %17 = sbr.rel (%p15) target = $region8
    $region5: #{tpu_custom_call.1} parent=1 // loop_body
      %s19 = ssub.s32 %s14, 1
      %s20 = ssub.s32 %s14, 2
      %s21 = sadd.s32 %s14, 1
      %s22 = ssub.s32 %s14, %s21
      %p23 = scmp.eq.s32.totalorder %s22, 0
      %s25 = sadd.s32 %s24, 1
      %s26 = scalar_select %p23, %s24, %s25
      %p29 = pneg %p23
      %p30 = scmp.eq.s32.totalorder %s14, 1
      %p31 = por %p29, %p30
      %p32 = scmp.ne.s32.totalorder %s24, %s27
      %p33 = scmp.eq.s32.totalorder %s14, 0
      %p34 = por %p32, %p33
      %p35 = scmp.ne.s32.totalorder %s24, %s27
      %p36 = scmp.eq.s32.totalorder %s19, 1
      %p37 = por %p35, %p36
      %p38 = scmp.ne.s32.totalorder %s27, %s28
      %p39 = scmp.eq.s32.totalorder %s19, 0
      %p40 = por %p38, %p39
      %p41 = scmp.ne.s32.totalorder %s27, %s28
      %p42 = scmp.eq.s32.totalorder %s20, 1
      %p43 = por %p41, %p42
      %p45 = scmp.ne.s32.totalorder %s28, %s44
      %p46 = scmp.eq.s32.totalorder %s20, 0
      %p47 = por %p45, %p46
      %s48 = ssub.s32 %s14, %s21
      %p49 = scmp.eq.s32.totalorder %s48, 0
      %s51 = sadd.s32 %s50, 1
      %s52 = scalar_select %p49, %s50, %s51
      %p55 = pneg %p49
      %p56 = scmp.eq.s32.totalorder %s14, 1
      %p57 = por %p55, %p56
      %p58 = scmp.ne.s32.totalorder %s50, %s53
      %p59 = scmp.eq.s32.totalorder %s14, 0
      %p60 = por %p58, %p59
      %p61 = scmp.ne.s32.totalorder %s50, %s53
      %p62 = scmp.eq.s32.totalorder %s19, 1
      %p63 = por %p61, %p62
      %p64 = scmp.ne.s32.totalorder %s53, %s54
      %p65 = scmp.eq.s32.totalorder %s19, 0
      %p66 = por %p64, %p65
      %p67 = scmp.ne.s32.totalorder %s53, %s54
      %p68 = scmp.eq.s32.totalorder %s20, 1
      %p69 = por %p67, %p68
      %p71 = scmp.ne.s32.totalorder %s54, %s70
      %p72 = scmp.eq.s32.totalorder %s20, 0
      %p73 = por %p71, %p72
      %s74 = ssub.s32 %s14, %s21
      %p75 = scmp.eq.s32.totalorder %s74, 0
      %s77 = sadd.s32 %s76, 1
      %s78 = scalar_select %p75, %s76, %s77
      %p81 = pneg %p75
      %p82 = scmp.eq.s32.totalorder %s14, 1
      %p83 = por %p81, %p82
      %p84 = scmp.ne.s32.totalorder %s76, %s79
      %p85 = scmp.eq.s32.totalorder %s14, 0
      %p86 = por %p84, %p85
      %p87 = scmp.ne.s32.totalorder %s76, %s79
      %p88 = scmp.eq.s32.totalorder %s19, 1
      %p89 = por %p87, %p88
      %p90 = scmp.ne.s32.totalorder %s79, %s80
      %p91 = scmp.eq.s32.totalorder %s19, 0
      %p92 = por %p90, %p91
      %p93 = scmp.ne.s32.totalorder %s79, %s80
      %p94 = scmp.eq.s32.totalorder %s20, 1
      %p95 = por %p93, %p94
      %p97 = scmp.ne.s32.totalorder %s80, %s96
      %p98 = scmp.eq.s32.totalorder %s20, 0
      %p99 = por %p97, %p98
      %p100 = scmp.le.s32.totalorder 1, %s14
      %p101 = scmp.lt.s32.totalorder %s14, 3
      %p102 = pnand %p100, %p101
      %p103 = pneg %p102
      // Predicated region
      $region9: #{tpu_custom_call.1} parent=5 // pred_check
        _
      $region10: #{tpu_custom_call.1} parent=5 // pred_check_branch
        %105 = sbr.rel (%p102) target = $region12
      $region11: #{tpu_custom_call.1} parent=5 // pred_region
        %s106 = ssub.s32 %s14, 1
      $region12: #{tpu_custom_call.1} parent=5 // pred_fallthru
        _
      %p107 = scmp.lt.s32.totalorder %s14, 2
      // Predicated region
      $region13: #{tpu_custom_call.1} parent=5 // pred_check
        %p108 = pneg %p107
      $region14: #{tpu_custom_call.1} parent=5 // pred_check_branch
        %110 = sbr.rel (%p108) target = $region16
      $region15: #{tpu_custom_call.1} parent=5 // pred_region
        // Predicated region
        $region17: #{tpu_custom_call.1} parent=15 // pred_check
          %p111 = pneg %p34
        $region18: #{tpu_custom_call.1} parent=15 // pred_check_branch
          %113 = sbr.rel (%p111) target = $region20
        $region19: #{tpu_custom_call.1} parent=15 // pred_region
          %p114 = scmp.lt.s32.totalorder %s14, 1
          %s115 = scalar_select %p114, %s14, 1
          %s116 = smul.addr %s115, 32
          %s117 = smul.addr %s116, 8
          %s118 = scalar_lea.vmem %s0, %s117
        $region20: #{tpu_custom_call.1} parent=15 // pred_fallthru
          _
        // Predicated region
        $region21: #{tpu_custom_call.1} parent=15 // pred_check
          %p119 = pneg %p60
        $region22: #{tpu_custom_call.1} parent=15 // pred_check_branch
          %121 = sbr.rel (%p119) target = $region24
        $region23: #{tpu_custom_call.1} parent=15 // pred_region
          %s122 = sand.u32 %s50, 1
          %s123 = scalar_lea.sflag [#allocation3], %s122
          %s124 = sand.u32 %s50, 1
          %s125 = smul.addr %s124, 512
          %s126 = scalar_lea.vmem [#allocation2], %s125
          %128 = vsyncadd %s123, 0
          %s129 = smul.addr %s14, 64
          %s130 = smul.addr %s129, 8
          %s131 = scalar_lea.hbm %s1, %s130
          %s132 = sshll.u32 %s131, 4
          %s133 = int_to_ptr.hbm [resolvable:$true] %s132
          %s134 = sshll.u32 %s126, 4
          %s135 = int_to_ptr.vmem [resolvable:$true] %s134
          %140 = dma.hbm_to_vmem [thread:$0]  %s133, 8192, %s135, %s123, 256, 256, 16
        $region24: #{tpu_custom_call.1} parent=15 // pred_fallthru
          _
      $region16: #{tpu_custom_call.1} parent=5 // pred_fallthru
        _
      %p141 = scmp.le.s32.totalorder 1, %s14
      %p142 = scmp.lt.s32.totalorder %s14, 3
      %p143 = pnand %p141, %p142
      %p144 = pneg %p143
      // Predicated region
      $region25: #{tpu_custom_call.1} parent=5 // pred_check
        _
      $region26: #{tpu_custom_call.1} parent=5 // pred_check_branch
        %146 = sbr.rel (%p143) target = $region28
      $region27: #{tpu_custom_call.1} parent=5 // pred_region
        %s147 = ssub.s32 %s14, 1
        %s148 = sand.u32 %s53, 1
        %s149 = scalar_lea.sflag [#allocation3], %s148
        %s150 = sand.u32 %s53, 1
        %s151 = smul.addr %s150, 512
        %s152 = scalar_lea.vmem [#allocation2], %s151
        // Predicated region
        $region29: #{tpu_custom_call.1} parent=27 // pred_check
          %p153 = pneg %p66
        $region30: #{tpu_custom_call.1} parent=27 // pred_check_branch
          %155 = sbr.rel (%p153) target = $region32
        $region31: #{tpu_custom_call.1} parent=27 // pred_region
          %157 = dma.done %s149, 8192
        $region32: #{tpu_custom_call.1} parent=27 // pred_fallthru
          _
        %p158 = scmp.lt.s32.totalorder %s19, 1
        %s159 = scalar_select %p158, %s19, 1
        %s160 = smul.addr %s159, 32
        %s161 = smul.addr %s160, 8
        %s162 = scalar_lea.vmem %s0, %s161
        %p163 = pneg %p40
        %p164 = pneg %p37
        %s165 = sand.u32 %s53, 1
        %s166 = scalar_lea.sflag [#allocation3], %s165
        %s167 = sand.u32 %s53, 1
        %s168 = smul.addr %s167, 512
        %s169 = scalar_lea.vmem [#allocation2], %s168
        %p170 = pneg %p66
        %p171 = pneg %p63
        %p172 = pneg %p92
        %p173 = pneg %p89
        %s174 = sand.u32 %s79, 1
        %s175 = scalar_lea.sflag [#allocation4], %s174
        %s176 = sand.u32 %s79, 1
        %s177 = smul.addr %s176, 512
        %s178 = scalar_lea.vmem [#allocation5], %s177
        %p179 = scmp.lt.s32.totalorder %s19, 1
        %s180 = scalar_select %p179, %s19, 1
        %s181 = smul.addr %s180, 32
        %s182 = smul.addr %s181, 8
        %s183 = scalar_lea.vmem %s0, %s182
        %v184 = vld [vmem:[%s183] sm:$0xff]
        %v185 = vld [vmem:[%s183 + $0x8] sm:$0xff]
        %v186 = vld [vmem:[%s183 + $0x10] sm:$0xff]
        %v187 = vld [vmem:[%s183 + $0x18] sm:$0xff]
        %v188 = vld [vmem:[%s183 + $0x20] sm:$0xff]
        %v189 = vld [vmem:[%s183 + $0x28] sm:$0xff]
        %v190 = vld [vmem:[%s183 + $0x30] sm:$0xff]
        %v191 = vld [vmem:[%s183 + $0x38] sm:$0xff]
        %v192 = vld [vmem:[%s183 + $0x40] sm:$0xff]
        %v193 = vld [vmem:[%s183 + $0x48] sm:$0xff]
        %v194 = vld [vmem:[%s183 + $0x50] sm:$0xff]
        %v195 = vld [vmem:[%s183 + $0x58] sm:$0xff]
        %v196 = vld [vmem:[%s183 + $0x60] sm:$0xff]
        %v197 = vld [vmem:[%s183 + $0x68] sm:$0xff]
        %v198 = vld [vmem:[%s183 + $0x70] sm:$0xff]
        %v199 = vld [vmem:[%s183 + $0x78] sm:$0xff]
        %v200 = vld [vmem:[%s183 + $0x80] sm:$0xff]
        %v201 = vld [vmem:[%s183 + $0x88] sm:$0xff]
        %v202 = vld [vmem:[%s183 + $0x90] sm:$0xff]
        %v203 = vld [vmem:[%s183 + $0x98] sm:$0xff]
        %v204 = vld [vmem:[%s183 + $0xa0] sm:$0xff]
        %v205 = vld [vmem:[%s183 + $0xa8] sm:$0xff]
        %v206 = vld [vmem:[%s183 + $0xb0] sm:$0xff]
        %v207 = vld [vmem:[%s183 + $0xb8] sm:$0xff]
        %v208 = vld [vmem:[%s183 + $0xc0] sm:$0xff]
        %v209 = vld [vmem:[%s183 + $0xc8] sm:$0xff]
        %v210 = vld [vmem:[%s183 + $0xd0] sm:$0xff]
        %v211 = vld [vmem:[%s183 + $0xd8] sm:$0xff]
        %v212 = vld [vmem:[%s183 + $0xe0] sm:$0xff]
        %v213 = vld [vmem:[%s183 + $0xe8] sm:$0xff]
        %v214 = vld [vmem:[%s183 + $0xf0] sm:$0xff]
        %v215 = vld [vmem:[%s183 + $0xf8] sm:$0xff]
        %vm216 = vcmask 23552
        %v217 = vsel %vm216, %v184, 0.0
        %218 = vadd.xlane.f32.xlu0 %v217
        %v219 = vpop.xlane.xlu0 %218
        %v220 = vsel %vm216, %v185, 0.0
        %221 = vadd.xlane.f32.xlu0 %v220
        %v222 = vpop.xlane.xlu0 %221
        %v223 = vsel %vm216, %v186, 0.0
        %224 = vadd.xlane.f32.xlu0 %v223
        %v225 = vpop.xlane.xlu0 %224
        %v226 = vsel %vm216, %v187, 0.0
        %227 = vadd.xlane.f32.xlu0 %v226
        %v228 = vpop.xlane.xlu0 %227
        %v229 = vsel %vm216, %v188, 0.0
        %230 = vadd.xlane.f32.xlu0 %v229
        %v231 = vpop.xlane.xlu0 %230
        %v232 = vsel %vm216, %v189, 0.0
        %233 = vadd.xlane.f32.xlu0 %v232
        %v234 = vpop.xlane.xlu0 %233
        %v235 = vsel %vm216, %v190, 0.0
        %236 = vadd.xlane.f32.xlu0 %v235
        %v237 = vpop.xlane.xlu0 %236
        %v238 = vsel %vm216, %v191, 0.0
        %239 = vadd.xlane.f32.xlu0 %v238
        %v240 = vpop.xlane.xlu0 %239
        %v241 = vsel %vm216, %v192, 0.0
        %242 = vadd.xlane.f32.xlu0 %v241
        %v243 = vpop.xlane.xlu0 %242
        %v244 = vsel %vm216, %v193, 0.0
        %245 = vadd.xlane.f32.xlu0 %v244
        %v246 = vpop.xlane.xlu0 %245
        %v247 = vsel %vm216, %v194, 0.0
        %248 = vadd.xlane.f32.xlu0 %v247
        %v249 = vpop.xlane.xlu0 %248
        %v250 = vsel %vm216, %v195, 0.0
        %251 = vadd.xlane.f32.xlu0 %v250
        %v252 = vpop.xlane.xlu0 %251
        %v253 = vsel %vm216, %v196, 0.0
        %254 = vadd.xlane.f32.xlu0 %v253
        %v255 = vpop.xlane.xlu0 %254
        %v256 = vsel %vm216, %v197, 0.0
        %257 = vadd.xlane.f32.xlu0 %v256
        %v258 = vpop.xlane.xlu0 %257
        %v259 = vsel %vm216, %v198, 0.0
        %260 = vadd.xlane.f32.xlu0 %v259
        %v261 = vpop.xlane.xlu0 %260
        %v262 = vsel %vm216, %v199, 0.0
        %263 = vadd.xlane.f32.xlu0 %v262
        %v264 = vpop.xlane.xlu0 %263
        %v265 = vsel %vm216, %v200, 0.0
        %266 = vadd.xlane.f32.xlu0 %v265
        %v267 = vpop.xlane.xlu0 %266
        %v268 = vsel %vm216, %v201, 0.0
        %269 = vadd.xlane.f32.xlu0 %v268
        %v270 = vpop.xlane.xlu0 %269
        %v271 = vsel %vm216, %v202, 0.0
        %272 = vadd.xlane.f32.xlu0 %v271
        %v273 = vpop.xlane.xlu0 %272
        %v274 = vsel %vm216, %v203, 0.0
        %275 = vadd.xlane.f32.xlu0 %v274
        %v276 = vpop.xlane.xlu0 %275
        %v277 = vsel %vm216, %v204, 0.0
        %278 = vadd.xlane.f32.xlu0 %v277
        %v279 = vpop.xlane.xlu0 %278
        %v280 = vsel %vm216, %v205, 0.0
        %281 = vadd.xlane.f32.xlu0 %v280
        %v282 = vpop.xlane.xlu0 %281
        %v283 = vsel %vm216, %v206, 0.0
        %284 = vadd.xlane.f32.xlu0 %v283
        %v285 = vpop.xlane.xlu0 %284
        %v286 = vsel %vm216, %v207, 0.0
        %287 = vadd.xlane.f32.xlu0 %v286
        %v288 = vpop.xlane.xlu0 %287
        %v289 = vsel %vm216, %v208, 0.0
        %290 = vadd.xlane.f32.xlu0 %v289
        %v291 = vpop.xlane.xlu0 %290
        %v292 = vsel %vm216, %v209, 0.0
        %293 = vadd.xlane.f32.xlu0 %v292
        %v294 = vpop.xlane.xlu0 %293
        %v295 = vsel %vm216, %v210, 0.0
        %296 = vadd.xlane.f32.xlu0 %v295
        %v297 = vpop.xlane.xlu0 %296
        %v298 = vsel %vm216, %v211, 0.0
        %299 = vadd.xlane.f32.xlu0 %v298
        %v300 = vpop.xlane.xlu0 %299
        %v301 = vsel %vm216, %v212, 0.0
        %302 = vadd.xlane.f32.xlu0 %v301
        %v303 = vpop.xlane.xlu0 %302
        %v304 = vsel %vm216, %v213, 0.0
        %305 = vadd.xlane.f32.xlu0 %v304
        %v306 = vpop.xlane.xlu0 %305
        %v307 = vsel %vm216, %v214, 0.0
        %308 = vadd.xlane.f32.xlu0 %v307
        %v309 = vpop.xlane.xlu0 %308
        %v310 = vsel %vm216, %v215, 0.0
        %311 = vadd.xlane.f32.xlu0 %v310
        %v312 = vpop.xlane.xlu0 %311
        %v313 = vmul.f32 %v219, 0.33333334
        %v314 = vmul.f32 %v222, 0.33333334
        %v315 = vmul.f32 %v225, 0.33333334
        %v316 = vmul.f32 %v228, 0.33333334
        %v317 = vmul.f32 %v231, 0.33333334
        %v318 = vmul.f32 %v234, 0.33333334
        %v319 = vmul.f32 %v237, 0.33333334
        %v320 = vmul.f32 %v240, 0.33333334
        %v321 = vmul.f32 %v243, 0.33333334
        %v322 = vmul.f32 %v246, 0.33333334
        %v323 = vmul.f32 %v249, 0.33333334
        %v324 = vmul.f32 %v252, 0.33333334
        %v325 = vmul.f32 %v255, 0.33333334
        %v326 = vmul.f32 %v258, 0.33333334
        %v327 = vmul.f32 %v261, 0.33333334
        %v328 = vmul.f32 %v264, 0.33333334
        %v329 = vmul.f32 %v267, 0.33333334
        %v330 = vmul.f32 %v270, 0.33333334
        %v331 = vmul.f32 %v273, 0.33333334
        %v332 = vmul.f32 %v276, 0.33333334
        %v333 = vmul.f32 %v279, 0.33333334
        %v334 = vmul.f32 %v282, 0.33333334
        %v335 = vmul.f32 %v285, 0.33333334
        %v336 = vmul.f32 %v288, 0.33333334
        %v337 = vmul.f32 %v291, 0.33333334
        %v338 = vmul.f32 %v294, 0.33333334
        %v339 = vmul.f32 %v297, 0.33333334
        %v340 = vmul.f32 %v300, 0.33333334
        %v341 = vmul.f32 %v303, 0.33333334
        %v342 = vmul.f32 %v306, 0.33333334
        %v343 = vmul.f32 %v309, 0.33333334
        %v344 = vmul.f32 %v312, 0.33333334
        %v345 = vld [vmem:[%s152] sm:$0xff]
        %v346 = vld [vmem:[%s152 + $0x8] sm:$0xff]
        %v347 = vld [vmem:[%s152 + $0x10] sm:$0xff]
        %v348 = vld [vmem:[%s152 + $0x18] sm:$0xff]
        %v349 = vld [vmem:[%s152 + $0x20] sm:$0xff]
        %v350 = vld [vmem:[%s152 + $0x28] sm:$0xff]
        %v351 = vld [vmem:[%s152 + $0x30] sm:$0xff]
        %v352 = vld [vmem:[%s152 + $0x38] sm:$0xff]
        %v353 = vld [vmem:[%s152 + $0x40] sm:$0xff]
        %v354 = vld [vmem:[%s152 + $0x48] sm:$0xff]
        %v355 = vld [vmem:[%s152 + $0x50] sm:$0xff]
        %v356 = vld [vmem:[%s152 + $0x58] sm:$0xff]
        %v357 = vld [vmem:[%s152 + $0x60] sm:$0xff]
        %v358 = vld [vmem:[%s152 + $0x68] sm:$0xff]
        %v359 = vld [vmem:[%s152 + $0x70] sm:$0xff]
        %v360 = vld [vmem:[%s152 + $0x78] sm:$0xff]
        %v361 = vld [vmem:[%s152 + $0x80] sm:$0xff]
        %v362 = vld [vmem:[%s152 + $0x88] sm:$0xff]
        %v363 = vld [vmem:[%s152 + $0x90] sm:$0xff]
        %v364 = vld [vmem:[%s152 + $0x98] sm:$0xff]
        %v365 = vld [vmem:[%s152 + $0xa0] sm:$0xff]
        %v366 = vld [vmem:[%s152 + $0xa8] sm:$0xff]
        %v367 = vld [vmem:[%s152 + $0xb0] sm:$0xff]
        %v368 = vld [vmem:[%s152 + $0xb8] sm:$0xff]
        %v369 = vld [vmem:[%s152 + $0xc0] sm:$0xff]
        %v370 = vld [vmem:[%s152 + $0xc8] sm:$0xff]
        %v371 = vld [vmem:[%s152 + $0xd0] sm:$0xff]
        %v372 = vld [vmem:[%s152 + $0xd8] sm:$0xff]
        %v373 = vld [vmem:[%s152 + $0xe0] sm:$0xff]
        %v374 = vld [vmem:[%s152 + $0xe8] sm:$0xff]
        %v375 = vld [vmem:[%s152 + $0xf0] sm:$0xff]
        %v376 = vld [vmem:[%s152 + $0xf8] sm:$0xff]
        %v377 = vld [vmem:[%s152 + $0x100] sm:$0xff]
        %v378 = vld [vmem:[%s152 + $0x108] sm:$0xff]
        %v379 = vld [vmem:[%s152 + $0x110] sm:$0xff]
        %v380 = vld [vmem:[%s152 + $0x118] sm:$0xff]
        %v381 = vld [vmem:[%s152 + $0x120] sm:$0xff]
        %v382 = vld [vmem:[%s152 + $0x128] sm:$0xff]
        %v383 = vld [vmem:[%s152 + $0x130] sm:$0xff]
        %v384 = vld [vmem:[%s152 + $0x138] sm:$0xff]
        %v385 = vld [vmem:[%s152 + $0x140] sm:$0xff]
        %v386 = vld [vmem:[%s152 + $0x148] sm:$0xff]
        %v387 = vld [vmem:[%s152 + $0x150] sm:$0xff]
        %v388 = vld [vmem:[%s152 + $0x158] sm:$0xff]
        %v389 = vld [vmem:[%s152 + $0x160] sm:$0xff]
        %v390 = vld [vmem:[%s152 + $0x168] sm:$0xff]
        %v391 = vld [vmem:[%s152 + $0x170] sm:$0xff]
        %v392 = vld [vmem:[%s152 + $0x178] sm:$0xff]
        %v393 = vld [vmem:[%s152 + $0x180] sm:$0xff]
        %v394 = vld [vmem:[%s152 + $0x188] sm:$0xff]
        %v395 = vld [vmem:[%s152 + $0x190] sm:$0xff]
        %v396 = vld [vmem:[%s152 + $0x198] sm:$0xff]
        %v397 = vld [vmem:[%s152 + $0x1a0] sm:$0xff]
        %v398 = vld [vmem:[%s152 + $0x1a8] sm:$0xff]
        %v399 = vld [vmem:[%s152 + $0x1b0] sm:$0xff]
        %v400 = vld [vmem:[%s152 + $0x1b8] sm:$0xff]
        %v401 = vld [vmem:[%s152 + $0x1c0] sm:$0xff]
        %v402 = vld [vmem:[%s152 + $0x1c8] sm:$0xff]
        %v403 = vld [vmem:[%s152 + $0x1d0] sm:$0xff]
        %v404 = vld [vmem:[%s152 + $0x1d8] sm:$0xff]
        %v405 = vld [vmem:[%s152 + $0x1e0] sm:$0xff]
        %v406 = vld [vmem:[%s152 + $0x1e8] sm:$0xff]
        %v407 = vld [vmem:[%s152 + $0x1f0] sm:$0xff]
        %v408 = vld [vmem:[%s152 + $0x1f8] sm:$0xff]
        %v409 = vmul.f32 %v345, 0.02
        %v410 = vmul.f32 %v346, 0.02
        %v411 = vmul.f32 %v347, 0.02
        %v412 = vmul.f32 %v348, 0.02
        %v413 = vmul.f32 %v349, 0.02
        %v414 = vmul.f32 %v350, 0.02
        %v415 = vmul.f32 %v351, 0.02
        %v416 = vmul.f32 %v352, 0.02
        %v417 = vmul.f32 %v353, 0.02
        %v418 = vmul.f32 %v354, 0.02
        %v419 = vmul.f32 %v355, 0.02
        %v420 = vmul.f32 %v356, 0.02
        %v421 = vmul.f32 %v357, 0.02
        %v422 = vmul.f32 %v358, 0.02
        %v423 = vmul.f32 %v359, 0.02
        %v424 = vmul.f32 %v360, 0.02
        %v425 = vmul.f32 %v361, 0.02
        %v426 = vmul.f32 %v362, 0.02
        %v427 = vmul.f32 %v363, 0.02
        %v428 = vmul.f32 %v364, 0.02
        %v429 = vmul.f32 %v365, 0.02
        %v430 = vmul.f32 %v366, 0.02
        %v431 = vmul.f32 %v367, 0.02
        %v432 = vmul.f32 %v368, 0.02
        %v433 = vmul.f32 %v369, 0.02
        %v434 = vmul.f32 %v370, 0.02
        %v435 = vmul.f32 %v371, 0.02
        %v436 = vmul.f32 %v372, 0.02
        %v437 = vmul.f32 %v373, 0.02
        %v438 = vmul.f32 %v374, 0.02
        %v439 = vmul.f32 %v375, 0.02
        %v440 = vmul.f32 %v376, 0.02
        %v441 = vmul.f32 %v377, 0.02
        %v442 = vmul.f32 %v378, 0.02
        %v443 = vmul.f32 %v379, 0.02
        %v444 = vmul.f32 %v380, 0.02
        %v445 = vmul.f32 %v381, 0.02
        %v446 = vmul.f32 %v382, 0.02
        %v447 = vmul.f32 %v383, 0.02
        %v448 = vmul.f32 %v384, 0.02
        %v449 = vmul.f32 %v385, 0.02
        %v450 = vmul.f32 %v386, 0.02
        %v451 = vmul.f32 %v387, 0.02
        %v452 = vmul.f32 %v388, 0.02
        %v453 = vmul.f32 %v389, 0.02
        %v454 = vmul.f32 %v390, 0.02
        %v455 = vmul.f32 %v391, 0.02
        %v456 = vmul.f32 %v392, 0.02
        %v457 = vmul.f32 %v393, 0.02
        %v458 = vmul.f32 %v394, 0.02
        %v459 = vmul.f32 %v395, 0.02
        %v460 = vmul.f32 %v396, 0.02
        %v461 = vmul.f32 %v397, 0.02
        %v462 = vmul.f32 %v398, 0.02
        %v463 = vmul.f32 %v399, 0.02
        %v464 = vmul.f32 %v400, 0.02
        %v465 = vmul.f32 %v401, 0.02
        %v466 = vmul.f32 %v402, 0.02
        %v467 = vmul.f32 %v403, 0.02
        %v468 = vmul.f32 %v404, 0.02
        %v469 = vmul.f32 %v405, 0.02
        %v470 = vmul.f32 %v406, 0.02
        %v471 = vmul.f32 %v407, 0.02
        %v472 = vmul.f32 %v408, 0.02
        %v473 = vadd.f32 %v313, %v409
        %v474 = vadd.f32 %v313, %v410
        %v475 = vadd.f32 %v314, %v411
        %v476 = vadd.f32 %v314, %v412
        %v477 = vadd.f32 %v315, %v413
        %v478 = vadd.f32 %v315, %v414
        %v479 = vadd.f32 %v316, %v415
        %v480 = vadd.f32 %v316, %v416
        %v481 = vadd.f32 %v317, %v417
        %v482 = vadd.f32 %v317, %v418
        %v483 = vadd.f32 %v318, %v419
        %v484 = vadd.f32 %v318, %v420
        %v485 = vadd.f32 %v319, %v421
        %v486 = vadd.f32 %v319, %v422
        %v487 = vadd.f32 %v320, %v423
        %v488 = vadd.f32 %v320, %v424
        %v489 = vadd.f32 %v321, %v425
        %v490 = vadd.f32 %v321, %v426
        %v491 = vadd.f32 %v322, %v427
        %v492 = vadd.f32 %v322, %v428
        %v493 = vadd.f32 %v323, %v429
        %v494 = vadd.f32 %v323, %v430
        %v495 = vadd.f32 %v324, %v431
        %v496 = vadd.f32 %v324, %v432
        %v497 = vadd.f32 %v325, %v433
        %v498 = vadd.f32 %v325, %v434
        %v499 = vadd.f32 %v326, %v435
        %v500 = vadd.f32 %v326, %v436
        %v501 = vadd.f32 %v327, %v437
        %v502 = vadd.f32 %v327, %v438
        %v503 = vadd.f32 %v328, %v439
        %v504 = vadd.f32 %v328, %v440
        %v505 = vadd.f32 %v329, %v441
        %v506 = vadd.f32 %v329, %v442
        %v507 = vadd.f32 %v330, %v443
        %v508 = vadd.f32 %v330, %v444
        %v509 = vadd.f32 %v331, %v445
        %v510 = vadd.f32 %v331, %v446
        %v511 = vadd.f32 %v332, %v447
        %v512 = vadd.f32 %v332, %v448
        %v513 = vadd.f32 %v333, %v449
        %v514 = vadd.f32 %v333, %v450
        %v515 = vadd.f32 %v334, %v451
        %v516 = vadd.f32 %v334, %v452
        %v517 = vadd.f32 %v335, %v453
        %v518 = vadd.f32 %v335, %v454
        %v519 = vadd.f32 %v336, %v455
        %v520 = vadd.f32 %v336, %v456
        %v521 = vadd.f32 %v337, %v457
        %v522 = vadd.f32 %v337, %v458
        %v523 = vadd.f32 %v338, %v459
        %v524 = vadd.f32 %v338, %v460
        %v525 = vadd.f32 %v339, %v461
        %v526 = vadd.f32 %v339, %v462
        %v527 = vadd.f32 %v340, %v463
        %v528 = vadd.f32 %v340, %v464
        %v529 = vadd.f32 %v341, %v465
        %v530 = vadd.f32 %v341, %v466
        %v531 = vadd.f32 %v342, %v467
        %v532 = vadd.f32 %v342, %v468
        %v533 = vadd.f32 %v343, %v469
        %v534 = vadd.f32 %v343, %v470
        %v535 = vadd.f32 %v344, %v471
        %v536 = vadd.f32 %v344, %v472
        %537 = vst [vmem:[%s178] sm:$0xff] %v473
        %538 = vst [vmem:[%s178 + $0x8] sm:$0xff] %v474
        %539 = vst [vmem:[%s178 + $0x10] sm:$0xff] %v475
        %540 = vst [vmem:[%s178 + $0x18] sm:$0xff] %v476
        %541 = vst [vmem:[%s178 + $0x20] sm:$0xff] %v477
        %542 = vst [vmem:[%s178 + $0x28] sm:$0xff] %v478
        %543 = vst [vmem:[%s178 + $0x30] sm:$0xff] %v479
        %544 = vst [vmem:[%s178 + $0x38] sm:$0xff] %v480
        %545 = vst [vmem:[%s178 + $0x40] sm:$0xff] %v481
        %546 = vst [vmem:[%s178 + $0x48] sm:$0xff] %v482
        %547 = vst [vmem:[%s178 + $0x50] sm:$0xff] %v483
        %548 = vst [vmem:[%s178 + $0x58] sm:$0xff] %v484
        %549 = vst [vmem:[%s178 + $0x60] sm:$0xff] %v485
        %550 = vst [vmem:[%s178 + $0x68] sm:$0xff] %v486
        %551 = vst [vmem:[%s178 + $0x70] sm:$0xff] %v487
        %552 = vst [vmem:[%s178 + $0x78] sm:$0xff] %v488
        %553 = vst [vmem:[%s178 + $0x80] sm:$0xff] %v489
        %554 = vst [vmem:[%s178 + $0x88] sm:$0xff] %v490
        %555 = vst [vmem:[%s178 + $0x90] sm:$0xff] %v491
        %556 = vst [vmem:[%s178 + $0x98] sm:$0xff] %v492
        %557 = vst [vmem:[%s178 + $0xa0] sm:$0xff] %v493
        %558 = vst [vmem:[%s178 + $0xa8] sm:$0xff] %v494
        %559 = vst [vmem:[%s178 + $0xb0] sm:$0xff] %v495
        %560 = vst [vmem:[%s178 + $0xb8] sm:$0xff] %v496
        %561 = vst [vmem:[%s178 + $0xc0] sm:$0xff] %v497
        %562 = vst [vmem:[%s178 + $0xc8] sm:$0xff] %v498
        %563 = vst [vmem:[%s178 + $0xd0] sm:$0xff] %v499
        %564 = vst [vmem:[%s178 + $0xd8] sm:$0xff] %v500
        %565 = vst [vmem:[%s178 + $0xe0] sm:$0xff] %v501
        %566 = vst [vmem:[%s178 + $0xe8] sm:$0xff] %v502
        %567 = vst [vmem:[%s178 + $0xf0] sm:$0xff] %v503
        %568 = vst [vmem:[%s178 + $0xf8] sm:$0xff] %v504
        %569 = vst [vmem:[%s178 + $0x100] sm:$0xff] %v505
        %570 = vst [vmem:[%s178 + $0x108] sm:$0xff] %v506
        %571 = vst [vmem:[%s178 + $0x110] sm:$0xff] %v507
        %572 = vst [vmem:[%s178 + $0x118] sm:$0xff] %v508
        %573 = vst [vmem:[%s178 + $0x120] sm:$0xff] %v509
        %574 = vst [vmem:[%s178 + $0x128] sm:$0xff] %v510
        %575 = vst [vmem:[%s178 + $0x130] sm:$0xff] %v511
        %576 = vst [vmem:[%s178 + $0x138] sm:$0xff] %v512
        %577 = vst [vmem:[%s178 + $0x140] sm:$0xff] %v513
        %578 = vst [vmem:[%s178 + $0x148] sm:$0xff] %v514
        %579 = vst [vmem:[%s178 + $0x150] sm:$0xff] %v515
        %580 = vst [vmem:[%s178 + $0x158] sm:$0xff] %v516
        %581 = vst [vmem:[%s178 + $0x160] sm:$0xff] %v517
        %582 = vst [vmem:[%s178 + $0x168] sm:$0xff] %v518
        %583 = vst [vmem:[%s178 + $0x170] sm:$0xff] %v519
        %584 = vst [vmem:[%s178 + $0x178] sm:$0xff] %v520
        %585 = vst [vmem:[%s178 + $0x180] sm:$0xff] %v521
        %586 = vst [vmem:[%s178 + $0x188] sm:$0xff] %v522
        %587 = vst [vmem:[%s178 + $0x190] sm:$0xff] %v523
        %588 = vst [vmem:[%s178 + $0x198] sm:$0xff] %v524
        %589 = vst [vmem:[%s178 + $0x1a0] sm:$0xff] %v525
        %590 = vst [vmem:[%s178 + $0x1a8] sm:$0xff] %v526
        %591 = vst [vmem:[%s178 + $0x1b0] sm:$0xff] %v527
        %592 = vst [vmem:[%s178 + $0x1b8] sm:$0xff] %v528
        %593 = vst [vmem:[%s178 + $0x1c0] sm:$0xff] %v529
        %594 = vst [vmem:[%s178 + $0x1c8] sm:$0xff] %v530
        %595 = vst [vmem:[%s178 + $0x1d0] sm:$0xff] %v531
        %596 = vst [vmem:[%s178 + $0x1d8] sm:$0xff] %v532
        %597 = vst [vmem:[%s178 + $0x1e0] sm:$0xff] %v533
        %598 = vst [vmem:[%s178 + $0x1e8] sm:$0xff] %v534
        %599 = vst [vmem:[%s178 + $0x1f0] sm:$0xff] %v535
        %600 = vst [vmem:[%s178 + $0x1f8] sm:$0xff] %v536
        %s601 = sand.u32 %s79, 1
        %s602 = scalar_lea.sflag [#allocation4], %s601
        %s603 = sand.u32 %s79, 1
        %s604 = smul.addr %s603, 512
        %s605 = scalar_lea.vmem [#allocation5], %s604
        // Predicated region
        $region33: #{tpu_custom_call.1} parent=27 // pred_check
          %p606 = pneg %p89
        $region34: #{tpu_custom_call.1} parent=27 // pred_check_branch
          %608 = sbr.rel (%p606) target = $region36
        $region35: #{tpu_custom_call.1} parent=27 // pred_region
          %610 = vsyncadd %s602, 0
          %s611 = smul.addr %s19, 64
          %s612 = smul.addr %s611, 8
          %s613 = scalar_lea.hbm %s2, %s612
          %s614 = sshll.u32 %s605, 4
          %s615 = int_to_ptr.vmem [resolvable:$true] %s614
          %s616 = sshll.u32 %s613, 4
          %s617 = int_to_ptr.hbm [resolvable:$true] %s616
          %622 = dma.vmem_to_hbm [thread:$0]  %s615, 8192, %s617, %s602, 256, 256, 16
        $region36: #{tpu_custom_call.1} parent=27 // pred_fallthru
          _
      $region28: #{tpu_custom_call.1} parent=5 // pred_fallthru
        _
      %p623 = scmp.le.s32.totalorder 2, %s14
      // Predicated region
      $region37: #{tpu_custom_call.1} parent=5 // pred_check
        %p624 = pneg %p623
      $region38: #{tpu_custom_call.1} parent=5 // pred_check_branch
        %626 = sbr.rel (%p624) target = $region40
      $region39: #{tpu_custom_call.1} parent=5 // pred_region
        %s627 = ssub.s32 %s14, 2
        // Predicated region
        $region41: #{tpu_custom_call.1} parent=39 // pred_check
          %p628 = pneg %p95
        $region42: #{tpu_custom_call.1} parent=39 // pred_check_branch
          %630 = sbr.rel (%p628) target = $region44
        $region43: #{tpu_custom_call.1} parent=39 // pred_region
          %s631 = sand.u32 %s80, 1
          %s632 = scalar_lea.sflag [#allocation4], %s631
          %s633 = sand.u32 %s80, 1
          %s634 = smul.addr %s633, 512
          %s635 = scalar_lea.vmem [#allocation5], %s634
          %637 = dma.done %s632, 8192
        $region44: #{tpu_custom_call.1} parent=39 // pred_fallthru
          _
      $region40: #{tpu_custom_call.1} parent=5 // pred_fallthru
        _
    $region6: #{tpu_custom_call.1} parent=1 // loop_footer
      %s18 = sadd.s32 1, %s14
    $region7: #{tpu_custom_call.1} parent=1 // loop_footer_branch
      %13 = sbr.rel target = $region3
    $region8: #{tpu_custom_call.1} parent=1 // loop_exit
      _
    %638 = vsyncpa [#allocation3], 1
    %s639 = scalar_lea.sflag [#allocation3], 1
    %640 = vsyncpa %s639, 1
    %641 = vsyncpa [#allocation4], 1
    %s642 = scalar_lea.sflag [#allocation4], 1
    %643 = vsyncpa %s642, 1

</llo_original>
